<compile_context>
chip_gen: v6e
topology: v6e:2x2x1
jax: 0.10.0
libtpu: 0.0.40
codegen_flags: <defaults>
</compile_context>

<pallas_src>
import functools

import jax
import jax.numpy as jnp
import numpy as np
from jax.experimental import pallas as pl
from jax.experimental.pallas import tpu as pltpu


def _round_up(v, m):
    return ((v + m - 1) // m) * m


def _vmem_caps():
    """(tile-sizing budget, scoped vmem limit cap) in bytes, generation-aware."""
    try:
        phys = int(pltpu.get_tpu_info().vmem_capacity_bytes)
    except Exception:
        phys = 128 * 1024 * 1024  # v5e/v6e physical; conservative fallback
    limit = min(phys * 5 // 8, 64 * 1024 * 1024)   # ~40 MiB on v7x, 64 MiB on v5e/v6e
    budget = max(16 * 1024 * 1024, limit - 8 * 1024 * 1024)
    return budget, limit


def _bytes_per_lane(c, nc, itemsize):
    """Rough VMEM bytes per lane of tile: DMA buffers + live compute values."""
    c_mem = _round_up(c, max(1, 32 // itemsize))          # sublane packing
    dma = 2 * c_mem * itemsize + 2 * 8 * 4                # dbl-buffered logits + target
    compute = 4 * (2 * _round_up(c, 8) + 6 * _round_up(nc, 8))   # live f32/int32 values
    return dma + compute


def _pick_tile(hw, c, nc, itemsize, budget, max_tile=64 * 1024):
    bpl = _bytes_per_lane(c, nc, itemsize)
    cap = max(128, (budget // bpl) // 128 * 128)
    return int(max(128, min(max_tile, cap, _round_up(hw, 128))))


def _dice_kernel(class_ref, logits_ref, target_ref, inter_ref, union_ref,
                 inter_acc, union_acc, *,
                 num_channels, hw_actual, tile, mask_tail,
                 pred_sentinel, tgt_sentinel):
    t = pl.program_id(1)

    @pl.when(t == 0)
    def _():
        inter_acc[...] = jnp.zeros_like(inter_acc)
        union_acc[...] = jnp.zeros_like(union_acc)

    logits = logits_ref[...]            # (C, tile), input dtype (batch squeezed)
    tgt = target_ref[...]               # (1, tile) int32

    # argmax over the channel (sublane) axis, first-occurrence tie-break
    # (matches torch.argmax).  Exact in bf16/f32 — comparisons only.
    mx = jnp.max(logits, axis=0, keepdims=True)                         # (1, tile)
    cidx = jax.lax.broadcasted_iota(jnp.int32, (num_channels, 1), 0)     # (C, 1)
    class_map = jnp.min(
        jnp.where(logits == mx, cidx, num_channels), axis=0, keepdims=True
    )                                                                    # (1, tile)

    if mask_tail:
        # Ragged last block: out-of-bounds lanes contain garbage in BOTH the
        # logits and the target; force them to sentinels never in class_ids.
        pos = t * tile + jax.lax.broadcasted_iota(jnp.int32, (1, tile), 1)
        in_bounds = pos < hw_actual
        class_map = jnp.where(in_bounds, class_map, pred_sentinel)
        tgt = jnp.where(in_bounds, tgt, tgt_sentinel)

    class_vec = class_ref[...][:, :1]          # (nc, 1) int32, passed-in ids
    pred_oh = class_map == class_vec           # (nc, tile) bool
    label_oh = tgt == class_vec                # (nc, tile) bool

    inter = jnp.logical_and(pred_oh, label_oh).astype(jnp.float32)
    union = jnp.logical_or(pred_oh, label_oh).astype(jnp.float32)

    # Lane reduction (XLU) each step into tiny (nc, 128) accumulators.
    inter_acc[...] = inter_acc[...] + jnp.sum(inter, axis=1, keepdims=True)
    union_acc[...] = union_acc[...] + jnp.sum(union, axis=1, keepdims=True)

    @pl.when(t == pl.num_programs(1) - 1)
    def _():
        inter_ref[...] = inter_acc[...]
        union_ref[...] = union_acc[...]


def dice_loss(x, target, valid_classes, tile=None):
    """x: (N, C, H, W) float logits; target: (N, H, W) int class ids."""
    n, c, h, w = x.shape
    hw = h * w
    class_ids = tuple(int(v) for v in valid_classes)
    nc = len(class_ids)
    assert nc >= 1

    itemsize = int(jnp.dtype(x.dtype).itemsize)
    budget, vmem_cap = _vmem_caps()
    if tile is None:
        tile = _pick_tile(hw, c, nc, itemsize, budget)
    num_tiles = pl.cdiv(hw, tile)

    logits = x.reshape(n, c, hw)                 # free reshape, keep input dtype
    tgt = target.reshape(n, 1, hw)
    if tgt.dtype != jnp.int32:
        tgt = tgt.astype(jnp.int32)

    # Class-id vector as a real kernel input (avoids captured-constant error).
    class_arr = jnp.broadcast_to(
        jnp.asarray(class_ids, dtype=jnp.int32)[:, None], (nc, 128))

    kernel = functools.partial(
        _dice_kernel,
        num_channels=c,
        hw_actual=hw,
        tile=tile,
        mask_tail=(hw % tile != 0),
        pred_sentinel=max(class_ids) + 1,    # never in class_ids
        tgt_sentinel=min(class_ids) - 1,     # never in class_ids
    )

    est_bytes = tile * _bytes_per_lane(c, nc, itemsize) + (2 << 20)
    vmem_limit = int(min(max(est_bytes, 16 << 20), vmem_cap))

    inter_out, union_out = pl.pallas_call(
        kernel,
        out_shape=(jax.ShapeDtypeStruct((n, nc, 128), jnp.float32),
                   jax.ShapeDtypeStruct((n, nc, 128), jnp.float32)),
        grid_spec=pltpu.PrefetchScalarGridSpec(
            num_scalar_prefetch=0,
            grid=(n, num_tiles),
            in_specs=[
                pl.BlockSpec((nc, 128), lambda b, t: (0, 0)),
                pl.BlockSpec((None, c, tile), lambda b, t: (b, 0, t)),
                pl.BlockSpec((None, 1, tile), lambda b, t: (b, 0, t)),
            ],
            out_specs=[
                pl.BlockSpec((None, nc, 128), lambda b, t: (b, 0, 0)),
                pl.BlockSpec((None, nc, 128), lambda b, t: (b, 0, 0)),
            ],
            scratch_shapes=[
                pltpu.VMEM((nc, 128), jnp.float32),   # per-class intersection
                pltpu.VMEM((nc, 128), jnp.float32),   # per-class union
            ],
        ),
        compiler_params=pltpu.CompilerParams(
            dimension_semantics=("parallel", "arbitrary"),
            vmem_limit_bytes=vmem_limit,
        ),
    )(class_arr, logits, tgt)

    # Tiny cross-sample reduction + per-class division in plain JAX.
    inter_tot = jnp.sum(inter_out[:, :, 0], axis=0)   # (nc,)
    union_tot = jnp.sum(union_out[:, :, 0], axis=0)   # (nc,)
    # NOTE: matches torch semantics exactly — no smoothing epsilon, so a class
    # absent from both prediction and target yields NaN, same as the reference.
    # Counts accumulate in f32; exact up to ~16.7M pixels per class per sample.
    return jnp.sum(inter_tot / union_tot) / jnp.float32(nc)


def dice_loss_ref(x, target, valid_classes):
    """Pure-JAX reference mirroring the PyTorch module."""
    class_map = jnp.argmax(x, axis=1)
    iou = jnp.float32(0.0)
    for c in valid_classes:
        pred_c = class_map == c
        label_c = target == c
        inter = jnp.sum(jnp.logical_and(pred_c, label_c)).astype(jnp.float32)
        union = jnp.sum(jnp.logical_or(pred_c, label_c)).astype(jnp.float32)
        iou = iou + inter / union
    return iou / len(valid_classes)


if __name__ == "__main__":
    key = jax.random.PRNGKey(0)
    k1, k2 = jax.random.split(key)

    N, C, H, W = 2, 4, 16, 16
    valid_classes = [0, 1, 2, 3]   # DiceLoss(valid_classes) — no learned params

    x = jax.random.normal(k1, (N, C, H, W), dtype=jnp.float32)
    target = jax.random.randint(k2, (N, H, W), 0, C, dtype=jnp.int32)

    out = dice_loss(x, target, valid_classes)
    out = jax.block_until_ready(out)

    ref = dice_loss_ref(x, target, valid_classes)
    assert np.allclose(np.asarray(out), np.asarray(ref), rtol=1e-5, atol=1e-5), (
        out, ref)

    print("KERNEL_OK")
</pallas_src>

<mosaic_0001>
module attributes {stable_mosaic.version = 11 : i64} {
  func.func @_dice_kernel(%arg0: i32, %arg1: i32, %arg2: memref<4x128xi32, #tpu.memory_space<vmem>>, %arg3: memref<1x4x256xf32, #tpu.memory_space<vmem>>, %arg4: memref<1x1x256xi32, #tpu.memory_space<vmem>>, %arg5: memref<1x4x128xf32, #tpu.memory_space<vmem>>, %arg6: memref<1x4x128xf32, #tpu.memory_space<vmem>>, %arg7: memref<4x128xf32, #tpu.memory_space<vmem>>, %arg8: memref<4x128xf32, #tpu.memory_space<vmem>>) attributes {dimension_semantics = [#tpu.dimension_semantics<parallel>, #tpu.dimension_semantics<arbitrary>], iteration_bounds = array<i64: 2, 1>, scalar_prefetch = 0 : i64, scratch_operands = 2 : i64, tpu.core_type = #tpu.core_type<tc>, window_params = [{pipeline_mode = #tpu.pipeline_mode<synchronous>, transform_indices = @transform_0, window_bounds = array<i64: 4, 128>}, {transform_indices = @transform_1, window_bounds = array<i64: 1, 4, 256>}, {transform_indices = @transform_2, window_bounds = array<i64: 1, 1, 256>}, {transform_indices = @transform_3, window_bounds = array<i64: 1, 4, 128>}, {transform_indices = @transform_4, window_bounds = array<i64: 1, 4, 128>}]} {
    %c0_i32 = arith.constant 0 : i32
    %0 = arith.cmpi eq, %arg1, %c0_i32 : i32
    %1 = arith.extui %0 : i1 to i32
    %c0_i32_0 = arith.constant 0 : i32
    %2 = arith.cmpi ne, %1, %c0_i32_0 : i32
    scf.if %2 {
      %cst_21 = arith.constant 0.000000e+00 : f32
      %47 = vector.broadcast %cst_21 : f32 to vector<4x128xf32>
      %c0_22 = arith.constant 0 : index
      %c0_23 = arith.constant 0 : index
      %48 = vector.load %arg7[%c0_22, %c0_23] : memref<4x128xf32, #tpu.memory_space<vmem>>, vector<4x128xf32>
      tpu.vector_store %arg7[%c0_22, %c0_23], %47 {strides = array<i32>} : memref<4x128xf32, #tpu.memory_space<vmem>>, vector<4x128xf32>,
      %cst_24 = arith.constant 0.000000e+00 : f32
      %49 = vector.broadcast %cst_24 : f32 to vector<4x128xf32>
      %c0_25 = arith.constant 0 : index
      %c0_26 = arith.constant 0 : index
      %50 = vector.load %arg8[%c0_25, %c0_26] : memref<4x128xf32, #tpu.memory_space<vmem>>, vector<4x128xf32>
      tpu.vector_store %arg8[%c0_25, %c0_26], %49 {strides = array<i32>} : memref<4x128xf32, #tpu.memory_space<vmem>>, vector<4x128xf32>,
    } else {
    }
    %c0 = arith.constant 0 : index
    %c0_1 = arith.constant 0 : index
    %c0_2 = arith.constant 0 : index
    %3 = vector.load %arg3[%c0, %c0_1, %c0_2] : memref<1x4x256xf32, #tpu.memory_space<vmem>>, vector<1x4x256xf32>
    %4 = vector.shape_cast %3 : vector<1x4x256xf32> to vector<4x256xf32>
    %c0_3 = arith.constant 0 : index
    %c0_4 = arith.constant 0 : index
    %c0_5 = arith.constant 0 : index
    %5 = vector.load %arg4[%c0_3, %c0_4, %c0_5] : memref<1x1x256xi32, #tpu.memory_space<vmem>>, vector<1x1x256xi32>
    %6 = vector.shape_cast %5 : vector<1x1x256xi32> to vector<1x256xi32>
    %cst = arith.constant dense<0xFF800000> : vector<256xf32>
    %7 = vector.multi_reduction <maximumf>, %4, %cst [0] : vector<4x256xf32> to vector<256xf32>
    %8 = vector.shape_cast %7 : vector<256xf32> to vector<1x256xf32>
    %9 = tpu.iota {dimensions = array<i32: 0>} : vector<4x1xi32>
    %10 = vector.broadcast %8 : vector<1x256xf32> to vector<4x256xf32>
    %11 = arith.cmpf oeq, %4, %10 : vector<4x256xf32>
    %c4_i32 = arith.constant 4 : i32
    %12 = vector.shape_cast %9 : vector<4x1xi32> to vector<4x1xi32>
    %13 = vector.broadcast %12 : vector<4x1xi32> to vector<4x256xi32>
    %14 = vector.broadcast %c4_i32 : i32 to vector<4x256xi32>
    %15 = arith.select %11, %13, %14 : vector<4x256xi1>, vector<4x256xi32>
    %cst_6 = arith.constant dense<2147483647> : vector<256xi32>
    %16 = vector.multi_reduction <minsi>, %15, %cst_6 [0] : vector<4x256xi32> to vector<256xi32>
    %17 = vector.shape_cast %16 : vector<256xi32> to vector<1x256xi32>
    %c0_7 = arith.constant 0 : index
    %c0_8 = arith.constant 0 : index
    %18 = vector.load %arg2[%c0_7, %c0_8] : memref<4x128xi32, #tpu.memory_space<vmem>>, vector<4x128xi32>
    %19 = vector.extract_strided_slice %18 {offsets = [0, 0], sizes = [4, 1], strides = [1, 1]} : vector<4x128xi32> to vector<4x1xi32>
    %20 = vector.broadcast %17 : vector<1x256xi32> to vector<4x256xi32>
    %21 = vector.broadcast %19 : vector<4x1xi32> to vector<4x256xi32>
    %22 = arith.cmpi eq, %20, %21 : vector<4x256xi32>
    %23 = vector.broadcast %6 : vector<1x256xi32> to vector<4x256xi32>
    %24 = vector.broadcast %19 : vector<4x1xi32> to vector<4x256xi32>
    %25 = arith.cmpi eq, %23, %24 : vector<4x256xi32>
    %26 = arith.andi %22, %25 : vector<4x256xi1>
    %27 = arith.extui %26 : vector<4x256xi1> to vector<4x256xi32>
    %28 = arith.sitofp %27 : vector<4x256xi32> to vector<4x256xf32>
    %29 = arith.ori %22, %25 : vector<4x256xi1>
    %30 = arith.extui %29 : vector<4x256xi1> to vector<4x256xi32>
    %31 = arith.sitofp %30 : vector<4x256xi32> to vector<4x256xf32>
    %c0_9 = arith.constant 0 : index
    %c0_10 = arith.constant 0 : index
    %32 = vector.load %arg7[%c0_9, %c0_10] : memref<4x128xf32, #tpu.memory_space<vmem>>, vector<4x128xf32>
    %cst_11 = arith.constant dense<0.000000e+00> : vector<4xf32>
    %33 = vector.multi_reduction <add>, %28, %cst_11 [1] : vector<4x256xf32> to vector<4xf32>
    %34 = vector.shape_cast %33 : vector<4xf32> to vector<4x1xf32>
    %35 = vector.broadcast %34 : vector<4x1xf32> to vector<4x128xf32>
    %36 = arith.addf %32, %35 : vector<4x128xf32>
    %c0_12 = arith.constant 0 : index
    %c0_13 = arith.constant 0 : index
    %37 = vector.load %arg7[%c0_12, %c0_13] : memref<4x128xf32, #tpu.memory_space<vmem>>, vector<4x128xf32>
    tpu.vector_store %arg7[%c0_12, %c0_13], %36 {strides = array<i32>} : memref<4x128xf32, #tpu.memory_space<vmem>>, vector<4x128xf32>,
    %c0_14 = arith.constant 0 : index
    %c0_15 = arith.constant 0 : index
    %38 = vector.load %arg8[%c0_14, %c0_15] : memref<4x128xf32, #tpu.memory_space<vmem>>, vector<4x128xf32>
    %cst_16 = arith.constant dense<0.000000e+00> : vector<4xf32>
    %39 = vector.multi_reduction <add>, %31, %cst_16 [1] : vector<4x256xf32> to vector<4xf32>
    %40 = vector.shape_cast %39 : vector<4xf32> to vector<4x1xf32>
    %41 = vector.broadcast %40 : vector<4x1xf32> to vector<4x128xf32>
    %42 = arith.addf %38, %41 : vector<4x128xf32>
    %c0_17 = arith.constant 0 : index
    %c0_18 = arith.constant 0 : index
    %43 = vector.load %arg8[%c0_17, %c0_18] : memref<4x128xf32, #tpu.memory_space<vmem>>, vector<4x128xf32>
    tpu.vector_store %arg8[%c0_17, %c0_18], %42 {strides = array<i32>} : memref<4x128xf32, #tpu.memory_space<vmem>>, vector<4x128xf32>,
    %c0_i32_19 = arith.constant 0 : i32
    %44 = arith.cmpi eq, %arg1, %c0_i32_19 : i32
    %45 = arith.extui %44 : i1 to i32
    %c0_i32_20 = arith.constant 0 : i32
    %46 = arith.cmpi ne, %45, %c0_i32_20 : i32
    scf.if %46 {
      %c0_21 = arith.constant 0 : index
      %c0_22 = arith.constant 0 : index
      %47 = vector.load %arg7[%c0_21, %c0_22] : memref<4x128xf32, #tpu.memory_space<vmem>>, vector<4x128xf32>
      %c0_23 = arith.constant 0 : index
      %c0_24 = arith.constant 0 : index
      %c0_25 = arith.constant 0 : index
      %48 = vector.load %arg5[%c0_23, %c0_24, %c0_25] : memref<1x4x128xf32, #tpu.memory_space<vmem>>, vector<1x4x128xf32>
      %49 = vector.shape_cast %48 : vector<1x4x128xf32> to vector<4x128xf32>
      %50 = vector.shape_cast %47 : vector<4x128xf32> to vector<1x4x128xf32>
      tpu.vector_store %arg5[%c0_23, %c0_24, %c0_25], %50 {strides = array<i32>} : memref<1x4x128xf32, #tpu.memory_space<vmem>>, vector<1x4x128xf32>,
      %c0_26 = arith.constant 0 : index
      %c0_27 = arith.constant 0 : index
      %51 = vector.load %arg8[%c0_26, %c0_27] : memref<4x128xf32, #tpu.memory_space<vmem>>, vector<4x128xf32>
      %c0_28 = arith.constant 0 : index
      %c0_29 = arith.constant 0 : index
      %c0_30 = arith.constant 0 : index
      %52 = vector.load %arg6[%c0_28, %c0_29, %c0_30] : memref<1x4x128xf32, #tpu.memory_space<vmem>>, vector<1x4x128xf32>
      %53 = vector.shape_cast %52 : vector<1x4x128xf32> to vector<4x128xf32>
      %54 = vector.shape_cast %51 : vector<4x128xf32> to vector<1x4x128xf32>
      tpu.vector_store %arg6[%c0_28, %c0_29, %c0_30], %54 {strides = array<i32>} : memref<1x4x128xf32, #tpu.memory_space<vmem>>, vector<1x4x128xf32>,
    } else {
    }
    return
  }
  func.func @transform_0(%arg0: i32, %arg1: i32) -> (i32, i32) {
    %c0_i32 = arith.constant 0 : i32
    %c0_i32_0 = arith.constant 0 : i32
    %c0_i32_1 = arith.constant 0 : i32
    return %c0_i32, %c0_i32_0 : i32, i32
  }
  func.func @transform_1(%arg0: i32, %arg1: i32) -> (i32, i32, i32) {
    %c0_i32 = arith.constant 0 : i32
    %c0_i32_0 = arith.constant 0 : i32
    return %arg0, %c0_i32, %arg1 : i32, i32, i32
  }
  func.func @transform_2(%arg0: i32, %arg1: i32) -> (i32, i32, i32) {
    %c0_i32 = arith.constant 0 : i32
    %c0_i32_0 = arith.constant 0 : i32
    return %arg0, %c0_i32, %arg1 : i32, i32, i32
  }
  func.func @transform_3(%arg0: i32, %arg1: i32) -> (i32, i32, i32) {
    %c0_i32 = arith.constant 0 : i32
    %c0_i32_0 = arith.constant 0 : i32
    %c0_i32_1 = arith.constant 0 : i32
    return %arg0, %c0_i32, %c0_i32_0 : i32, i32, i32
  }
  func.func @transform_4(%arg0: i32, %arg1: i32) -> (i32, i32, i32) {
    %c0_i32 = arith.constant 0 : i32
    %c0_i32_0 = arith.constant 0 : i32
    %c0_i32_1 = arith.constant 0 : i32
    return %arg0, %c0_i32, %c0_i32_0 : i32, i32, i32
  }
}

</mosaic_0001>

<llo_original>
// kernel: tpu_custom_call.1
$region0: #{tpu_custom_call.1}
  #allocation0 [shape = 'u32[]', space=smem, size = 0x4, offset = 0x4, fixed_abs, tag = 'smem constant byte address 0x4 - core index']
  #allocation1 [shape = 'u32[144,128]{1,0:T(1,128)}', space=vmem, size = 0x12000, scoped, tag = 'internal scratch']
  #allocation2 [shape = 'f32[4,128]{1,0:T(4,128)}', space=vmem, size = 0x800, scoped, tag = 'scratch operand']
  #allocation3 [shape = 'f32[4,128]{1,0:T(4,128)}', space=vmem, size = 0x800, scoped, tag = 'scratch operand']
  %s0 = inlined_call_operand.hbm [shape: s32[4,128], index: 0, kind: input, shape index: {}]
  %s1 = inlined_call_operand.hbm [shape: f32[2,4,256], index: 1, kind: input, shape index: {}]
  %s2 = inlined_call_operand.hbm [shape: s32[2,1,256], index: 2, kind: input, shape index: {}]
  %s3 = inlined_call_operand.hbm [shape: f32[2,4,128], index: 3, kind: output, shape index: {0}]
  %s4 = inlined_call_operand.hbm [shape: f32[2,4,128], index: 4, kind: output, shape index: {1}]
  %5 = xla_tuple %s3, %s4
  %s6 = sld [smem:[#allocation0]]
  $region73: #{tpu_custom_call.1} parent=0
    _
  %s8 = ssub.s32 1, %s6
  %s9 = scalar_select 0, %s8, %s6
  $region1: #{tpu_custom_call.1} parent=0
    #allocation4 [shape = 'u8[2048]{0}', space=vmem, size = 0x800, scoped, tag = 'input window, operand 0, single buffered']
    #allocation5 [shape = 's32[2]{0}', space=sflag, size = 0x8, scoped, tag = 'scoped memory for tpu_custom_call.1']
    #allocation6 [shape = 's32[2]{0}', space=sflag, size = 0x8, scoped, tag = 'scoped memory for tpu_custom_call.1']
    #allocation7 [shape = 'u8[8192]{0}', space=vmem, size = 0x2000, scoped, tag = 'input window, operand 1']
    #allocation8 [shape = 's32[2]{0}', space=sflag, size = 0x8, scoped, tag = 'scoped memory for tpu_custom_call.1']
    #allocation9 [shape = 'u8[2048]{0}', space=vmem, size = 0x800, scoped, tag = 'input window, operand 2']
    #allocation10 [shape = 'u8[4096]{0}', space=vmem, size = 0x1000, scoped, tag = 'output window, operand 0']
    #allocation11 [shape = 'u8[4096]{0}', space=vmem, size = 0x1000, scoped, tag = 'output window, operand 1']
    #allocation12 [shape = 's32[2]{0}', space=sflag, size = 0x8, scoped, tag = 'scoped memory for tpu_custom_call.1']
    %10 = vsyncpa [#allocation5], 0
    %11 = vsyncpa [#allocation8], 0
    %s12 = scalar_lea.sflag [#allocation8], 1
    %13 = vsyncpa %s12, 0
    %14 = vsyncpa [#allocation6], 0
    %s15 = scalar_lea.sflag [#allocation6], 1
    %16 = vsyncpa %s15, 0
    %17 = vsyncpa [#allocation12], 0
    %s18 = scalar_lea.sflag [#allocation12], 1
    %19 = vsyncpa %s18, 0
    loop: start=0, step=1, limit=4
    $region2: #{tpu_custom_call.1} parent=1 // loop_pre_header
      _
    $region3: #{tpu_custom_call.1} parent=1 // loop_header
      %s21 = sphi 0, %s25
      %p22 = scmp.ge.s32.totalorder %s21, 4
      %s28 = sphi 0, %s40
      %s29 = sphi 0, %s36
      %s30 = sphi 0, %s28
      %s31 = sphi 0, %s29
      %s32 = sphi 0, %s30
      %s33 = sphi 0, %s31
      %s41 = sphi 0, %s41
      %s43 = sphi 0, %s41
      %s44 = sphi 0, %s43
      %s58 = sphi 0, %s44
      %s66 = sphi 0, %s68
      %s69 = sphi 0, %s66
      %s70 = sphi 0, %s69
      %s86 = sphi 0, %s70
      %s94 = sphi 0, %s96
      %s97 = sphi 0, %s94
      %s98 = sphi 0, %s97
      %s114 = sphi 0, %s98
      %s120 = sphi 0, %s122
      %s123 = sphi 0, %s120
      %s124 = sphi 0, %s123
      %s140 = sphi 0, %s124
      %s146 = sphi 0, %s148
      %s149 = sphi 0, %s146
      %s150 = sphi 0, %s149
      %s166 = sphi 0, %s150
    $region4: #{tpu_custom_call.1} parent=1 // loop_header_branch
      %24 = sbr.rel (%p22) target = $region8
    $region5: #{tpu_custom_call.1} parent=1 // loop_body
      %s26 = ssub.s32 %s21, 1
      %s27 = ssub.s32 %s21, 2
      %s34 = sadd.s32 1, %s29
      %p35 = scmp.ge.s32.totalorder %s34, 1
      %s36 = scalar_select %p35, 0, %s34
      %s37 = sadd.s32 1, %s28
      %s38 = scalar_select %p35, %s37, %s28
      %p39 = scmp.ge.s32.totalorder %s38, 2
      %s40 = scalar_select %p39, 0, %s38
      %s42 = sadd.s32 %s41, 1
      %p45 = scmp.eq.s32.totalorder %s21, 1
      %p46 = scmp.ne.s32.totalorder %s41, %s43
      %p47 = scmp.eq.s32.totalorder %s21, 0
      %p48 = por %p46, %p47
      %p49 = scmp.ne.s32.totalorder %s41, %s43
      %p50 = scmp.eq.s32.totalorder %s26, 1
      %p51 = por %p49, %p50
      %p52 = scmp.ne.s32.totalorder %s43, %s44
      %p53 = scmp.eq.s32.totalorder %s26, 0
      %p54 = por %p52, %p53
      %p55 = scmp.ne.s32.totalorder %s43, %s44
      %p56 = scmp.eq.s32.totalorder %s27, 1
      %p57 = por %p55, %p56
      %p59 = scmp.ne.s32.totalorder %s44, %s58
      %p60 = scmp.eq.s32.totalorder %s27, 0
      %p61 = por %p59, %p60
      %s62 = ssub.s32 %s28, %s40
      %s63 = ssub.s32 %s29, %s36
      %s64 = sor.u32 %s62, %s63
      %p65 = scmp.eq.s32.totalorder %s64, 0
      %s67 = sadd.s32 %s66, 1
      %s68 = scalar_select %p65, %s66, %s67
      %p71 = pneg %p65
      %p72 = scmp.eq.s32.totalorder %s21, 1
      %p73 = por %p71, %p72
      %p74 = scmp.ne.s32.totalorder %s66, %s69
      %p75 = scmp.eq.s32.totalorder %s21, 0
      %p76 = por %p74, %p75
      %p77 = scmp.ne.s32.totalorder %s66, %s69
      %p78 = scmp.eq.s32.totalorder %s26, 1
      %p79 = por %p77, %p78
      %p80 = scmp.ne.s32.totalorder %s69, %s70
      %p81 = scmp.eq.s32.totalorder %s26, 0
      %p82 = por %p80, %p81
      %p83 = scmp.ne.s32.totalorder %s69, %s70
      %p84 = scmp.eq.s32.totalorder %s27, 1
      %p85 = por %p83, %p84
      %p87 = scmp.ne.s32.totalorder %s70, %s86
      %p88 = scmp.eq.s32.totalorder %s27, 0
      %p89 = por %p87, %p88
      %s90 = ssub.s32 %s28, %s40
      %s91 = ssub.s32 %s29, %s36
      %s92 = sor.u32 %s90, %s91
      %p93 = scmp.eq.s32.totalorder %s92, 0
      %s95 = sadd.s32 %s94, 1
      %s96 = scalar_select %p93, %s94, %s95
      %p99 = pneg %p93
      %p100 = scmp.eq.s32.totalorder %s21, 1
      %p101 = por %p99, %p100
      %p102 = scmp.ne.s32.totalorder %s94, %s97
      %p103 = scmp.eq.s32.totalorder %s21, 0
      %p104 = por %p102, %p103
      %p105 = scmp.ne.s32.totalorder %s94, %s97
      %p106 = scmp.eq.s32.totalorder %s26, 1
      %p107 = por %p105, %p106
      %p108 = scmp.ne.s32.totalorder %s97, %s98
      %p109 = scmp.eq.s32.totalorder %s26, 0
      %p110 = por %p108, %p109
      %p111 = scmp.ne.s32.totalorder %s97, %s98
      %p112 = scmp.eq.s32.totalorder %s27, 1
      %p113 = por %p111, %p112
      %p115 = scmp.ne.s32.totalorder %s98, %s114
      %p116 = scmp.eq.s32.totalorder %s27, 0
      %p117 = por %p115, %p116
      %s118 = ssub.s32 %s28, %s40
      %p119 = scmp.eq.s32.totalorder %s118, 0
      %s121 = sadd.s32 %s120, 1
      %s122 = scalar_select %p119, %s120, %s121
      %p125 = pneg %p119
      %p126 = scmp.eq.s32.totalorder %s21, 1
      %p127 = por %p125, %p126
      %p128 = scmp.ne.s32.totalorder %s120, %s123
      %p129 = scmp.eq.s32.totalorder %s21, 0
      %p130 = por %p128, %p129
      %p131 = scmp.ne.s32.totalorder %s120, %s123
      %p132 = scmp.eq.s32.totalorder %s26, 1
      %p133 = por %p131, %p132
      %p134 = scmp.ne.s32.totalorder %s123, %s124
      %p135 = scmp.eq.s32.totalorder %s26, 0
      %p136 = por %p134, %p135
      %p137 = scmp.ne.s32.totalorder %s123, %s124
      %p138 = scmp.eq.s32.totalorder %s27, 1
      %p139 = por %p137, %p138
      %p141 = scmp.ne.s32.totalorder %s124, %s140
      %p142 = scmp.eq.s32.totalorder %s27, 0
      %p143 = por %p141, %p142
      %s144 = ssub.s32 %s28, %s40
      %p145 = scmp.eq.s32.totalorder %s144, 0
      %s147 = sadd.s32 %s146, 1
      %s148 = scalar_select %p145, %s146, %s147
      %p151 = pneg %p145
      %p152 = scmp.eq.s32.totalorder %s21, 1
      %p153 = por %p151, %p152
      %p154 = scmp.ne.s32.totalorder %s146, %s149
      %p155 = scmp.eq.s32.totalorder %s21, 0
      %p156 = por %p154, %p155
      %p157 = scmp.ne.s32.totalorder %s146, %s149
      %p158 = scmp.eq.s32.totalorder %s26, 1
      %p159 = por %p157, %p158
      %p160 = scmp.ne.s32.totalorder %s149, %s150
      %p161 = scmp.eq.s32.totalorder %s26, 0
      %p162 = por %p160, %p161
      %p163 = scmp.ne.s32.totalorder %s149, %s150
      %p164 = scmp.eq.s32.totalorder %s27, 1
      %p165 = por %p163, %p164
      %p167 = scmp.ne.s32.totalorder %s150, %s166
      %p168 = scmp.eq.s32.totalorder %s27, 0
      %p169 = por %p167, %p168
      %p170 = scmp.le.s32.totalorder 1, %s21
      %p171 = scmp.lt.s32.totalorder %s21, 3
      %p172 = pnand %p170, %p171
      %p173 = pneg %p172
      // Predicated region
      $region9: #{tpu_custom_call.1} parent=5 // pred_check
        _
      $region10: #{tpu_custom_call.1} parent=5 // pred_check_branch
        %175 = sbr.rel (%p172) target = $region12
      $region11: #{tpu_custom_call.1} parent=5 // pred_region
        %s176 = ssub.s32 %s21, 1
        // Predicated region
        $region13: #{tpu_custom_call.1} parent=11 // pred_check
          %p177 = pneg %p54
        $region14: #{tpu_custom_call.1} parent=11 // pred_check_branch
          %179 = sbr.rel (%p177) target = $region16
        $region15: #{tpu_custom_call.1} parent=11 // pred_region
          %s181 = ssub.s32 64, 64
          %182 = vsyncadd [#allocation5], %s181
          %s184 = sshll.u32 [#allocation4], 4
          %s185 = int_to_ptr.vmem [resolvable:$true] %s184
          %187 = dma.hbm_to_vmem [thread:$0]  %s0, 64, %s185, [#allocation5]
        $region16: #{tpu_custom_call.1} parent=11 // pred_fallthru
          _
      $region12: #{tpu_custom_call.1} parent=5 // pred_fallthru
        _
      %p188 = scmp.lt.s32.totalorder %s21, 2
      // Predicated region
      $region17: #{tpu_custom_call.1} parent=5 // pred_check
        %p189 = pneg %p188
      $region18: #{tpu_custom_call.1} parent=5 // pred_check_branch
        %191 = sbr.rel (%p189) target = $region20
      $region19: #{tpu_custom_call.1} parent=5 // pred_region
        // Predicated region
        $region21: #{tpu_custom_call.1} parent=19 // pred_check
          %p192 = pneg %p76
        $region22: #{tpu_custom_call.1} parent=19 // pred_check_branch
          %194 = sbr.rel (%p192) target = $region24
        $region23: #{tpu_custom_call.1} parent=19 // pred_region
          %s195 = sand.u32 %s21, 1
          %s196 = scalar_lea.sflag [#allocation8], %s195
          %s197 = sand.u32 %s66, 1
          %s198 = smul.addr %s197, 8
          %s199 = scalar_lea.vmem [#allocation7], %s198
          %s200 = smul.u32 2, %s29
          %s202 = ssub.s32 128, 128
          %203 = vsyncadd %s196, %s202
          %s204 = smul.addr %s28, 2
          %s205 = sadd.s32 %s200, %s204
          %s206 = smul.addr %s205, 64
          %s207 = scalar_lea.hbm %s1, %s206
          %s209 = sshll.u32 %s199, 4
          %s210 = int_to_ptr.vmem [resolvable:$true] %s209
          %212 = dma.hbm_to_vmem [thread:$0]  %s207, 128, %s210, %s196
        $region24: #{tpu_custom_call.1} parent=19 // pred_fallthru
          _
        // Predicated region
        $region25: #{tpu_custom_call.1} parent=19 // pred_check
          %p213 = pneg %p104
        $region26: #{tpu_custom_call.1} parent=19 // pred_check_branch
          %215 = sbr.rel (%p213) target = $region28
        $region27: #{tpu_custom_call.1} parent=19 // pred_region
          %s216 = sand.u32 %s21, 1
          %s217 = scalar_lea.sflag [#allocation8], %s216
          %s218 = sand.u32 %s94, 1
          %s219 = smul.addr %s218, 2
          %s220 = scalar_lea.vmem [#allocation9], %s219
          %s221 = smul.u32 2, %s29
          %s223 = ssub.s32 32, 32
          %224 = vsyncadd %s217, %s223
          %s225 = smul.addr %s28, 2
          %s226 = sadd.s32 %s221, %s225
          %s227 = smul.addr %s226, 16
          %s228 = scalar_lea.hbm %s2, %s227
          %s230 = sshll.u32 %s220, 4
          %s231 = int_to_ptr.vmem [resolvable:$true] %s230
          %233 = dma.hbm_to_vmem [thread:$0]  %s228, 32, %s231, %s217
        $region28: #{tpu_custom_call.1} parent=19 // pred_fallthru
          _
      $region20: #{tpu_custom_call.1} parent=5 // pred_fallthru
        _
      %p234 = scmp.le.s32.totalorder 1, %s21
      %p235 = scmp.lt.s32.totalorder %s21, 3
      %p236 = pnand %p234, %p235
      %p237 = pneg %p236
      // Predicated region
      $region29: #{tpu_custom_call.1} parent=5 // pred_check
        _
      $region30: #{tpu_custom_call.1} parent=5 // pred_check_branch
        %239 = sbr.rel (%p236) target = $region32
      $region31: #{tpu_custom_call.1} parent=5 // pred_region
        %s240 = ssub.s32 %s21, 1
        // Predicated region
        $region33: #{tpu_custom_call.1} parent=31 // pred_check
          %p241 = pneg %p54
        $region34: #{tpu_custom_call.1} parent=31 // pred_check_branch
          %243 = sbr.rel (%p241) target = $region36
        $region35: #{tpu_custom_call.1} parent=31 // pred_region
          %244 = dma.done [#allocation5], 64
        $region36: #{tpu_custom_call.1} parent=31 // pred_fallthru
          _
        %s245 = sand.u32 %s26, 1
        %s246 = scalar_lea.sflag [#allocation8], %s245
        %s247 = sand.u32 %s69, 1
        %s248 = smul.addr %s247, 8
        %s249 = scalar_lea.vmem [#allocation7], %s248
        // Predicated region
        $region37: #{tpu_custom_call.1} parent=31 // pred_check
          %p250 = pneg %p82
        $region38: #{tpu_custom_call.1} parent=31 // pred_check_branch
          %252 = sbr.rel (%p250) target = $region40
        $region39: #{tpu_custom_call.1} parent=31 // pred_region
          %253 = dma.done %s246, 128
        $region40: #{tpu_custom_call.1} parent=31 // pred_fallthru
          _
        %s254 = sand.u32 %s26, 1
        %s255 = scalar_lea.sflag [#allocation8], %s254
        %s256 = sand.u32 %s97, 1
        %s257 = smul.addr %s256, 2
        %s258 = scalar_lea.vmem [#allocation9], %s257
        // Predicated region
        $region41: #{tpu_custom_call.1} parent=31 // pred_check
          %p259 = pneg %p110
        $region42: #{tpu_custom_call.1} parent=31 // pred_check_branch
          %261 = sbr.rel (%p259) target = $region44
        $region43: #{tpu_custom_call.1} parent=31 // pred_region
          %262 = dma.done %s255, 32
        $region44: #{tpu_custom_call.1} parent=31 // pred_fallthru
          _
        %p263 = pneg %p54
        %p264 = pneg %p51
        %s265 = sand.u32 %s26, 1
        %s266 = scalar_lea.sflag [#allocation8], %s265
        %s267 = sand.u32 %s69, 1
        %s268 = smul.addr %s267, 8
        %s269 = scalar_lea.vmem [#allocation7], %s268
        %p270 = pneg %p82
        %p271 = pneg %p79
        %s272 = sand.u32 %s26, 1
        %s273 = scalar_lea.sflag [#allocation8], %s272
        %s274 = sand.u32 %s97, 1
        %s275 = smul.addr %s274, 2
        %s276 = scalar_lea.vmem [#allocation9], %s275
        %p277 = pneg %p110
        %p278 = pneg %p107
        %p279 = pneg %p136
        %p280 = pneg %p133
        %s281 = sand.u32 %s123, 1
        %s282 = scalar_lea.sflag [#allocation6], %s281
        %s283 = sand.u32 %s123, 1
        %s284 = smul.addr %s283, 4
        %s285 = scalar_lea.vmem [#allocation10], %s284
        %p286 = pneg %p162
        %p287 = pneg %p159
        %s288 = sand.u32 %s149, 1
        %s289 = scalar_lea.sflag [#allocation12], %s288
        %s290 = sand.u32 %s149, 1
        %s291 = smul.addr %s290, 4
        %s292 = scalar_lea.vmem [#allocation11], %s291
        %s293 = smul.u32 2, %s31
        %s294 = smul.u32 2, %s31
        %p295 = scmp.eq.s32.totalorder %s31, 0
        // Predicated region
        $region45: #{tpu_custom_call.1} parent=31 // pred_check
          %p296 = pneg %p295
        $region46: #{tpu_custom_call.1} parent=31 // pred_check_branch
          %298 = sbr.rel (%p296) target = $region48
        $region47: #{tpu_custom_call.1} parent=31 // pred_region
          %299 = vst [vmem:[#allocation2] sm:$0xf] 0.0
          %300 = vst [vmem:[#allocation3] sm:$0xf] 0.0
        $region48: #{tpu_custom_call.1} parent=31 // pred_fallthru
          _
        %v301 = vld [vmem:[%s249] sm:$0xff]
        %v302 = vld [vmem:[%s258] sm:$0x3]
        %v304 = vcombine.high %v301, %v301
        %vm306 = vcmask 1043456
        %v307 = vsel %vm306, %v301, -inf
        %v308 = vrot.slane %v307, 4
        %v309 = vmax.f32 %v307, %v308
        %v310 = vrot.slane %v309, 2
        %v311 = vmax.f32 %v309, %v310
        %v312 = vrot.slane %v311, 1
        %v313 = vmax.f32 %v311, %v312
        %v314 = vsel %vm306, %v304, -inf
        %v315 = vrot.slane %v314, 4
        %v316 = vmax.f32 %v314, %v315
        %v317 = vrot.slane %v316, 2
        %v318 = vmax.f32 %v316, %v317
        %v319 = vrot.slane %v318, 1
        %v320 = vmax.f32 %v318, %v319
        %v321 = vlaneseq
        %v322 = vshrl.u32 %v321, 7
        %v325 = vcombine.low %v313, %v320
        %vm327 = vcmp.eq.f32.partialorder %v301, %v325
        %v329 = vunpack.c.l.s4 839922192
        %v330 = vunpack.c.0.s8 %v329
        %v331 = vlaneseq
        %v332 = vshrl.u32 %v331, 7
        %v333 = vsub.s32 %v330, %v332
        %v334 = vrot.slane %v322, %v333
        %v335 = vsel %vm327, %v334, 4
        %v336 = vcombine.high %v335, %v335
        %v337 = vsel %vm306, %v335, 2147483647
        %v338 = vrot.slane %v337, 4
        %vm339 = vcmp.lt.s32.totalorder %v337, %v338
        %v340 = vsel %vm339, %v337, %v338
        %v341 = vrot.slane %v340, 2
        %vm342 = vcmp.lt.s32.totalorder %v340, %v341
        %v343 = vsel %vm342, %v340, %v341
        %v344 = vrot.slane %v343, 1
        %vm345 = vcmp.lt.s32.totalorder %v343, %v344
        %v346 = vsel %vm345, %v343, %v344
        %v347 = vsel %vm306, %v336, 2147483647
        %v348 = vrot.slane %v347, 4
        %vm349 = vcmp.lt.s32.totalorder %v347, %v348
        %v350 = vsel %vm349, %v347, %v348
        %v351 = vrot.slane %v350, 2
        %vm352 = vcmp.lt.s32.totalorder %v350, %v351
        %v353 = vsel %vm352, %v350, %v351
        %v354 = vrot.slane %v353, 1
        %vm355 = vcmp.lt.s32.totalorder %v353, %v354
        %v356 = vsel %vm355, %v353, %v354
        %v357 = vld [vmem:[#allocation4] sm:$0xf]
        %358 = vset.pattern.permute.xlu0 0
        %359 = vperm.xlu0 %358, %v357
        %v360 = vpop.permute.xlu0 %359
        %vm361 = vcmp.eq.s32.totalorder %v346, %v360
        %vm362 = vcmp.eq.s32.totalorder %v356, %v360
        %v363 = vlaneseq
        %v364 = vshrl.u32 %v363, 7
        %v365 = vsub.s32 0, %v364
        %v366 = vrot.slane %v302, %v365
        %v367 = vlaneseq
        %v368 = vshrl.u32 %v367, 7
        %v369 = vsub.s32 1, %v368
        %v370 = vrot.slane %v302, %v369
        %vm371 = vcmp.eq.s32.totalorder %v366, %v360
        %vm372 = vcmp.eq.s32.totalorder %v370, %v360
        %vm373 = vmand %vm361, %vm371
        %vm374 = vmand %vm362, %vm372
        %v375 = vsel %vm373, 1, 0
        %v376 = vsel %vm374, 1, 0
        %v377 = vcvt.s32.f32 %v375
        %v378 = vcvt.s32.f32 %v376
        %vm379 = vmor %vm361, %vm371
        %vm380 = vmor %vm362, %vm372
        %v381 = vsel %vm379, 1, 0
        %v382 = vsel %vm380, 1, 0
        %v383 = vcvt.s32.f32 %v381
        %v384 = vcvt.s32.f32 %v382
        %v385 = vld [vmem:[#allocation2] sm:$0xf]
        %v386 = vsel %vm306, %v377, 0.0
        %v387 = vsel %vm306, %v378, 0.0
        %v388 = vadd.f32 %v386, %v387
        %389 = vadd.xlane.f32.xlu0 %v388
        %v390 = vpop.xlane.xlu0 %389
        %v391 = vadd.f32 %v385, %v390
        %392 = vst [vmem:[#allocation2] sm:$0xf] %v391
        %v393 = vld [vmem:[#allocation3] sm:$0xf]
        %v394 = vsel %vm306, %v383, 0.0
        %v395 = vsel %vm306, %v384, 0.0
        %v396 = vadd.f32 %v394, %v395
        %397 = vadd.xlane.f32.xlu0 %v396
        %v398 = vpop.xlane.xlu0 %397
        %v399 = vadd.f32 %v393, %v398
        %400 = vst [vmem:[#allocation3] sm:$0xf] %v399
        // Predicated region
        $region49: #{tpu_custom_call.1} parent=31 // pred_check
          %p401 = pneg %p295
        $region50: #{tpu_custom_call.1} parent=31 // pred_check_branch
          %403 = sbr.rel (%p401) target = $region52
        $region51: #{tpu_custom_call.1} parent=31 // pred_region
          %v404 = vld [vmem:[#allocation2] sm:$0xf]
          %405 = vst [vmem:[%s285] sm:$0xf] %v404
          %v406 = vld [vmem:[#allocation3] sm:$0xf]
          %407 = vst [vmem:[%s292] sm:$0xf] %v406
        $region52: #{tpu_custom_call.1} parent=31 // pred_fallthru
          _
        %s408 = sand.u32 %s123, 1
        %s409 = scalar_lea.sflag [#allocation6], %s408
        %s410 = sand.u32 %s123, 1
        %s411 = smul.addr %s410, 4
        %s412 = scalar_lea.vmem [#allocation10], %s411
        %s413 = sand.u32 %s149, 1
        %s414 = scalar_lea.sflag [#allocation12], %s413
        %s415 = sand.u32 %s149, 1
        %s416 = smul.addr %s415, 4
        %s417 = scalar_lea.vmem [#allocation11], %s416
        // Predicated region
        $region53: #{tpu_custom_call.1} parent=31 // pred_check
          %p418 = pneg %p133
        $region54: #{tpu_custom_call.1} parent=31 // pred_check_branch
          %420 = sbr.rel (%p418) target = $region56
        $region55: #{tpu_custom_call.1} parent=31 // pred_region
          %s422 = ssub.s32 64, 64
          %423 = vsyncadd %s409, %s422
          %s424 = smul.addr %s30, 64
          %s425 = scalar_lea.hbm %s3, %s424
          %s427 = sshll.u32 %s412, 4
          %s428 = int_to_ptr.vmem [resolvable:$true] %s427
          %430 = dma.vmem_to_hbm [thread:$0]  %s428, 64, %s425, %s409
        $region56: #{tpu_custom_call.1} parent=31 // pred_fallthru
          _
        // Predicated region
        $region57: #{tpu_custom_call.1} parent=31 // pred_check
          %p431 = pneg %p159
        $region58: #{tpu_custom_call.1} parent=31 // pred_check_branch
          %433 = sbr.rel (%p431) target = $region60
        $region59: #{tpu_custom_call.1} parent=31 // pred_region
          %s435 = ssub.s32 64, 64
          %436 = vsyncadd %s414, %s435
          %s437 = smul.addr %s30, 64
          %s438 = scalar_lea.hbm %s4, %s437
          %s440 = sshll.u32 %s417, 4
          %s441 = int_to_ptr.vmem [resolvable:$true] %s440
          %443 = dma.vmem_to_hbm [thread:$0]  %s441, 64, %s438, %s414
        $region60: #{tpu_custom_call.1} parent=31 // pred_fallthru
          _
      $region32: #{tpu_custom_call.1} parent=5 // pred_fallthru
        _
      %p444 = scmp.le.s32.totalorder 2, %s21
      // Predicated region
      $region61: #{tpu_custom_call.1} parent=5 // pred_check
        %p445 = pneg %p444
      $region62: #{tpu_custom_call.1} parent=5 // pred_check_branch
        %447 = sbr.rel (%p445) target = $region64
      $region63: #{tpu_custom_call.1} parent=5 // pred_region
        %s448 = ssub.s32 %s21, 2
        // Predicated region
        $region65: #{tpu_custom_call.1} parent=63 // pred_check
          %p449 = pneg %p139
        $region66: #{tpu_custom_call.1} parent=63 // pred_check_branch
          %451 = sbr.rel (%p449) target = $region68
        $region67: #{tpu_custom_call.1} parent=63 // pred_region
          %s452 = sand.u32 %s124, 1
          %s453 = scalar_lea.sflag [#allocation6], %s452
          %s454 = sand.u32 %s124, 1
          %s455 = smul.addr %s454, 4
          %s456 = scalar_lea.vmem [#allocation10], %s455
          %457 = dma.done %s453, 64
        $region68: #{tpu_custom_call.1} parent=63 // pred_fallthru
          _
        // Predicated region
        $region69: #{tpu_custom_call.1} parent=63 // pred_check
          %p458 = pneg %p165
        $region70: #{tpu_custom_call.1} parent=63 // pred_check_branch
          %460 = sbr.rel (%p458) target = $region72
        $region71: #{tpu_custom_call.1} parent=63 // pred_region
          %s461 = sand.u32 %s150, 1
          %s462 = scalar_lea.sflag [#allocation12], %s461
          %s463 = sand.u32 %s150, 1
          %s464 = smul.addr %s463, 4
          %s465 = scalar_lea.vmem [#allocation11], %s464
          %466 = dma.done %s462, 64
        $region72: #{tpu_custom_call.1} parent=63 // pred_fallthru
          _
      $region64: #{tpu_custom_call.1} parent=5 // pred_fallthru
        _
    $region6: #{tpu_custom_call.1} parent=1 // loop_footer
      %s25 = sadd.s32 1, %s21
    $region7: #{tpu_custom_call.1} parent=1 // loop_footer_branch
      %20 = sbr.rel target = $region3
    $region8: #{tpu_custom_call.1} parent=1 // loop_exit
      _
    %467 = vsyncpa [#allocation5], 1
    %s468 = scalar_lea.sflag [#allocation5], 1
    %469 = vsyncpa %s468, 1
    %470 = vsyncpa [#allocation8], 1
    %s471 = scalar_lea.sflag [#allocation8], 1
    %472 = vsyncpa %s471, 1
    %473 = vsyncpa [#allocation6], 1
    %s474 = scalar_lea.sflag [#allocation6], 1
    %475 = vsyncpa %s474, 1
    %476 = vsyncpa [#allocation12], 1
    %s477 = scalar_lea.sflag [#allocation12], 1
    %478 = vsyncpa %s477, 1

</llo_original>
